<compile_context>
chip_gen: v6e
topology: v6e:2x2x1
jax: 0.10.0
libtpu: 0.0.40
codegen_flags: <defaults>
</compile_context>

<pallas_src>
import functools

import jax
import jax.numpy as jnp
from jax.experimental import pallas as pl
from jax.experimental.pallas import tpu as pltpu


# ---------------------------------------------------------------------------
# helpers
# ---------------------------------------------------------------------------

def _round_down(x, m):
    return (x // m) * m


def _sublane_multiple(dtype):
    itemsize = jnp.dtype(dtype).itemsize
    return {4: 8, 2: 16, 1: 32}.get(itemsize, 8)


def _vmem_budget_and_limit():
    """Chip-aware tile budget / scoped VMEM limit."""
    cap = 64 * 1024 * 1024  # conservative default = v7x per-TC VMEM
    try:
        info = pltpu.get_tpu_info()
        cap = int(getattr(info, "vmem_capacity_bytes", cap)) or cap
    except Exception:
        pass
    budget = int(0.45 * cap)   # named in/out tiles (double buffered)
    limit = int(0.85 * cap)    # scoped limit handed to the compiler
    return budget, limit


def _choose_channel_tile(C, N, L, dtype, budget, min_grid_steps=4):
    """Channel tile for the single-pass kernel.

    Returns 0 when even the minimum sublane-aligned tile does not fit the
    budget -> caller switches to the two-pass (C, HW)-tiled path.
    """
    itemsize = jnp.dtype(dtype).itemsize
    sub = _sublane_multiple(dtype)
    per_channel = N * L * itemsize
    fit_ct = budget // max(1, 4 * per_channel)        # 2 bufs x (in + out)
    if fit_ct < min(C, sub):
        return 0
    if C <= sub:
        return C
    # keep >= min_grid_steps grid steps so pipelining overlaps and both v7x
    # TensorCores get work; align to the dtype's sublane packing
    target_ct = max(sub, _round_down(max(1, C // min_grid_steps), sub))
    ct = _round_down(min(fit_ct, target_ct), sub)
    return max(sub, min(ct, C))


# ---------------------------------------------------------------------------
# single-pass kernels (full HW per block, channel-tiled grid)
# ---------------------------------------------------------------------------

def _bn_kernel(x_ref, gain_ref, bias_ref, o_ref, mean_ref, var_ref, *, eps, inv_n):
    # x_ref: (N, ct, HW); gain/bias/mean/var refs: (ct, 1)
    x = x_ref[...]
    # sums in f32; square in f32 too (per-vreg fused upcast, kernel is HBM-bound)
    m = jnp.sum(x, axis=(0, 2), keepdims=True, dtype=jnp.float32) * inv_n
    m2 = jnp.sum(jnp.square(x.astype(jnp.float32)), axis=(0, 2), keepdims=True) * inv_n
    var = jnp.maximum(m2 - m * m, 0.0)            # clamp: cancellation safety

    scale = jax.lax.rsqrt(var + eps) * gain_ref[...][None]   # (1, ct, 1)
    shift = m * scale - bias_ref[...][None]                  # (1, ct, 1)

    o_ref[...] = (x.astype(jnp.float32) * scale - shift).astype(o_ref.dtype)
    mean_ref[...] = m[0]
    var_ref[...] = var[0]


def _bn_kernel_packed(x_ref, gain_ref, bias_ref, o_ref, mean_ref, var_ref,
                      *, eps, hw, inv_n):
    # Lane-packed small-HW path: x_ref is (N, ct_groups, 128) where each group
    # of 128 lanes holds g = 128//hw channels, hw lanes each.
    # gain/bias/mean/var refs are (ct_groups, 128), per-lane broadcast.
    x = x_ref[...]
    xf = x.astype(jnp.float32)
    L = x.shape[-1]

    # Block-diagonal ones matrix: B[l, l2] = 1 iff lanes l, l2 belong to the
    # same hw-wide channel segment.  xs @ B == "sum within segment, broadcast
    # back to every lane of the segment" -- one MXU matmul, no relayouts.
    r = jax.lax.broadcasted_iota(jnp.int32, (L, L), 0)
    c = jax.lax.broadcasted_iota(jnp.int32, (L, L), 1)
    seg = (r // hw == c // hw).astype(jnp.float32)

    xs = jnp.sum(xf, axis=0)                      # (ct, L)
    xq = jnp.sum(xf * xf, axis=0)                 # (ct, L)
    m = jnp.dot(xs, seg, preferred_element_type=jnp.float32) * inv_n
    m2 = jnp.dot(xq, seg, preferred_element_type=jnp.float32) * inv_n
    var = jnp.maximum(m2 - m * m, 0.0)

    scale = jax.lax.rsqrt(var + eps) * gain_ref[...]          # (ct, L)
    shift = m * scale - bias_ref[...]                         # (ct, L)

    o_ref[...] = (xf * scale[None] - shift[None]).astype(o_ref.dtype)
    mean_ref[...] = m
    var_ref[...] = var


# ---------------------------------------------------------------------------
# two-pass path for activations too large for a full-HW channel tile
# ---------------------------------------------------------------------------

def _stats_kernel(x_ref, sum_ref, sq_ref, acc_s, acc_q, *, thw, hw_total):
    hw_i = pl.program_id(1)

    @pl.when(hw_i == 0)
    def _():
        acc_s[...] = jnp.zeros_like(acc_s)
        acc_q[...] = jnp.zeros_like(acc_q)

    xf = x_ref[...].astype(jnp.float32)           # (N, ct, thw)
    if hw_total % thw != 0:
        # mask the padded tail of the last HW block (OOB block reads are
        # unspecified and would pollute the per-channel sums)
        lane = jax.lax.broadcasted_iota(jnp.int32, xf.shape, 2) + hw_i * thw
        xf = jnp.where(lane < hw_total, xf, 0.0)

    acc_s[...] += jnp.sum(xf, axis=(0, 2), keepdims=True)[0]
    acc_q[...] += jnp.sum(xf * xf, axis=(0, 2), keepdims=True)[0]

    @pl.when(hw_i == pl.num_programs(1) - 1)
    def _():
        sum_ref[...] = acc_s[...]
        sq_ref[...] = acc_q[...]


def _normalize_kernel(x_ref, scale_ref, shift_ref, o_ref):
    x = x_ref[...].astype(jnp.float32)
    o_ref[...] = (x * scale_ref[...][None] - shift_ref[...][None]).astype(o_ref.dtype)


def _bn_two_pass(x3, gain, bias, eps, N, C, HW, budget, limit):
    dtype = x3.dtype
    itemsize = jnp.dtype(dtype).itemsize
    sub = _sublane_multiple(dtype)
    ct = C if C <= sub else sub

    max_thw = budget // max(1, 4 * N * ct * itemsize)
    thw = _round_down(max_thw, 128)
    if thw <= 0:
        # TODO(synk): truly enormous N with a minimal (ct, 128) tile can still
        # exceed the scoped VMEM limit; would need N-tiling as well.
        thw = 128
    if thw >= HW:
        thw = HW

    grid = (pl.cdiv(C, ct), pl.cdiv(HW, thw))

    sum_c, sq_c = pl.pallas_call(
        functools.partial(_stats_kernel, thw=thw, hw_total=HW),
        out_shape=(jax.ShapeDtypeStruct((C, 1), jnp.float32),
                   jax.ShapeDtypeStruct((C, 1), jnp.float32)),
        grid=grid,
        in_specs=[pl.BlockSpec((N, ct, thw), lambda c, h: (0, c, h))],
        out_specs=(pl.BlockSpec((ct, 1), lambda c, h: (c, 0)),
                   pl.BlockSpec((ct, 1), lambda c, h: (c, 0))),
        scratch_shapes=[pltpu.VMEM((ct, 1), jnp.float32),
                        pltpu.VMEM((ct, 1), jnp.float32)],
        compiler_params=pltpu.CompilerParams(
            dimension_semantics=("parallel", "arbitrary"),
            vmem_limit_bytes=limit),
    )(x3)

    inv_n = 1.0 / (N * HW)
    mean_c = (sum_c.reshape(C) * inv_n)
    var_c = jnp.maximum(sq_c.reshape(C) * inv_n - mean_c * mean_c, 0.0)
    scale_c = jax.lax.rsqrt(var_c + eps) * gain.astype(jnp.float32)
    shift_c = mean_c * scale_c - bias.astype(jnp.float32)

    out3 = pl.pallas_call(
        _normalize_kernel,
        out_shape=jax.ShapeDtypeStruct((N, C, HW), dtype),
        grid=grid,
        in_specs=[pl.BlockSpec((N, ct, thw), lambda c, h: (0, c, h)),
                  pl.BlockSpec((ct, 1), lambda c, h: (c, 0)),
                  pl.BlockSpec((ct, 1), lambda c, h: (c, 0))],
        out_specs=pl.BlockSpec((N, ct, thw), lambda c, h: (0, c, h)),
        compiler_params=pltpu.CompilerParams(
            dimension_semantics=("parallel", "parallel"),
            vmem_limit_bytes=limit),
    )(x3, scale_c.reshape(C, 1), shift_c.reshape(C, 1))

    return out3, mean_c, var_c


# ---------------------------------------------------------------------------
# public wrapper
# ---------------------------------------------------------------------------

def bn_forward(x_nchw, gain, bias, *, eps=1e-5, return_mean_var=False,
               vmem_budget_bytes=None):
    """Training-mode batch norm forward (matches F.batch_norm output).

    x_nchw: (N, C, H, W); gain, bias: (C,).
    If return_mean_var, also returns per-channel batch mean and biased var
    ((C,), f32) so the running-stat update needs no second pass over x.
    """
    N, C, H, W = x_nchw.shape
    HW = H * W
    dtype = x_nchw.dtype

    budget, limit = _vmem_budget_and_limit()
    if vmem_budget_bytes is not None:
        budget = vmem_budget_bytes

    # Lane packing for small spatial extents: fold g adjacent channels into the
    # 128-lane axis (free reshape) so stores stay lane-dense.
    g = 1
    if HW < 128 and 128 % HW == 0 and C % (128 // HW) == 0:
        g = 128 // HW
    Cg, L = C // g, g * HW

    ct = _choose_channel_tile(Cg, N, L, dtype, budget)
    if ct == 0:
        # Activation too large for a full-HW channel tile -> two-pass path.
        out3, mean_c, var_c = _bn_two_pass(
            x_nchw.reshape(N, C, HW), gain, bias, eps, N, C, HW, budget, limit)
        out = out3.reshape(N, C, H, W)
        return (out, mean_c, var_c) if return_mean_var else out

    x3 = x_nchw.reshape(N, Cg, L)                 # free reshape, no transpose
    inv_n = 1.0 / (N * HW)
    if g == 1:
        stat_cols = 1
        gain_b = gain.reshape(C, 1).astype(jnp.float32)
        bias_b = bias.reshape(C, 1).astype(jnp.float32)
        kernel = functools.partial(_bn_kernel, eps=eps, inv_n=inv_n)
    else:
        stat_cols = L
        gain_b = jnp.repeat(gain.reshape(Cg, g).astype(jnp.float32), HW, axis=1)
        bias_b = jnp.repeat(bias.reshape(Cg, g).astype(jnp.float32), HW, axis=1)
        kernel = functools.partial(_bn_kernel_packed, eps=eps, hw=HW, inv_n=inv_n)

    grid = (pl.cdiv(Cg, ct),)
    # NOTE: if profiles show exposed DMA on short grids, a pl.Buffered(3)
    # pipeline_mode on the x spec is a cheap low-single-digit-% follow-up.
    out3, mean_b, var_b = pl.pallas_call(
        kernel,
        out_shape=(jax.ShapeDtypeStruct((N, Cg, L), dtype),
                   jax.ShapeDtypeStruct((Cg, stat_cols), jnp.float32),
                   jax.ShapeDtypeStruct((Cg, stat_cols), jnp.float32)),
        grid=grid,
        in_specs=[pl.BlockSpec((N, ct, L), lambda c: (0, c, 0)),
                  pl.BlockSpec((ct, stat_cols), lambda c: (c, 0)),
                  pl.BlockSpec((ct, stat_cols), lambda c: (c, 0))],
        out_specs=(pl.BlockSpec((N, ct, L), lambda c: (0, c, 0)),
                   pl.BlockSpec((ct, stat_cols), lambda c: (c, 0)),
                   pl.BlockSpec((ct, stat_cols), lambda c: (c, 0))),
        compiler_params=pltpu.CompilerParams(
            dimension_semantics=("parallel",),
            vmem_limit_bytes=limit),
    )(x3, gain_b, bias_b)

    out = out3.reshape(N, C, H, W)
    if g == 1:
        mean_c = mean_b.reshape(C)
        var_c = var_b.reshape(C)
    else:
        mean_c = mean_b.reshape(Cg, g, HW)[:, :, 0].reshape(C)
        var_c = var_b.reshape(Cg, g, HW)[:, :, 0].reshape(C)
    return (out, mean_c, var_c) if return_mean_var else out


def update_running_stats(mean_c, var_biased_c, stored_mean, stored_var, n,
                         *, momentum=0.1):
    """F.batch_norm training-mode side effect (unbiased var, momentum update)."""
    var_unbiased = var_biased_c * (n / (n - 1))
    new_mean = stored_mean * (1.0 - momentum) + mean_c * momentum
    new_var = stored_var * (1.0 - momentum) + var_unbiased * momentum
    return new_mean, new_var


# ---------------------------------------------------------------------------
# tests
# ---------------------------------------------------------------------------

def _reference(x, gain, bias, eps):
    m = jnp.mean(x, axis=(0, 2, 3))
    v = jnp.mean(x * x, axis=(0, 2, 3)) - m * m
    out = (x - m[None, :, None, None]) * jax.lax.rsqrt(v + eps)[None, :, None, None] \
        * gain[None, :, None, None] + bias[None, :, None, None]
    return out, m, v


if __name__ == "__main__":
    key = jax.random.PRNGKey(0)
    eps = 1e-5
    momentum = 0.1

    # --- test 1: main path (HW >= 128, single-pass, no lane packing) ---------
    N, C, H, W = 2, 4, 16, 16
    kx, kg, kb = jax.random.split(key, 3)
    x = jax.random.normal(kx, (N, C, H, W), dtype=jnp.float32)
    gain = jnp.ones((C,), jnp.float32) + 0.1 * jax.random.normal(kg, (C,))
    bias = jnp.zeros((C,), jnp.float32) + 0.1 * jax.random.normal(kb, (C,))

    out, bm, bv = bn_forward(x, gain, bias, eps=eps, return_mean_var=True)
    out, bm, bv = jax.block_until_ready((out, bm, bv))
    ref, m_ref, v_ref = _reference(x, gain, bias, eps)
    assert jnp.allclose(out, ref, atol=1e-4, rtol=1e-4)
    assert jnp.allclose(bm, m_ref, atol=1e-5, rtol=1e-5)
    assert jnp.allclose(bv, v_ref, atol=1e-5, rtol=1e-5)

    n_elems = N * H * W
    stored_mean = jnp.zeros((C,), jnp.float32)
    stored_var = jnp.ones((C,), jnp.float32)
    new_mean, new_var = update_running_stats(bm, bv, stored_mean, stored_var,
                                             n_elems, momentum=momentum)
    new_mean, new_var = jax.block_until_ready((new_mean, new_var))
    assert jnp.allclose(new_mean, stored_mean * (1 - momentum) + m_ref * momentum,
                        atol=1e-5, rtol=1e-5)
    assert jnp.allclose(new_var,
                        stored_var * (1 - momentum)
                        + v_ref * (n_elems / (n_elems - 1)) * momentum,
                        atol=1e-5, rtol=1e-5)

    # --- test 2: small-HW lane-packed path (HW = 64 -> g = 2) ----------------
    N2, C2, H2, W2 = 2, 16, 8, 8
    k1, k2, k3 = jax.random.split(jax.random.PRNGKey(1), 3)
    x2 = jax.random.normal(k1, (N2, C2, H2, W2), dtype=jnp.float32)
    gain2 = jnp.ones((C2,), jnp.float32) + 0.1 * jax.random.normal(k2, (C2,))
    bias2 = jnp.zeros((C2,), jnp.float32) + 0.1 * jax.random.normal(k3, (C2,))
    out2, bm2, bv2 = bn_forward(x2, gain2, bias2, eps=eps, return_mean_var=True)
    out2, bm2, bv2 = jax.block_until_ready((out2, bm2, bv2))
    ref2, m2_ref, v2_ref = _reference(x2, gain2, bias2, eps)
    assert jnp.allclose(out2, ref2, atol=1e-4, rtol=1e-4)
    assert jnp.allclose(bm2, m2_ref, atol=1e-5, rtol=1e-5)
    assert jnp.allclose(bv2, v2_ref, atol=1e-5, rtol=1e-5)

    # --- test 3: two-pass HW-tiled path (forced via a tiny tile budget) ------
    N3, C3, H3, W3 = 2, 16, 16, 20
    k1, k2, k3 = jax.random.split(jax.random.PRNGKey(2), 3)
    x3 = jax.random.normal(k1, (N3, C3, H3, W3), dtype=jnp.float32)
    gain3 = jnp.ones((C3,), jnp.float32) + 0.1 * jax.random.normal(k2, (C3,))
    bias3 = jnp.zeros((C3,), jnp.float32) + 0.1 * jax.random.normal(k3, (C3,))
    out3, bm3, bv3 = bn_forward(x3, gain3, bias3, eps=eps, return_mean_var=True,
                                vmem_budget_bytes=40_000)
    out3, bm3, bv3 = jax.block_until_ready((out3, bm3, bv3))
    ref3, m3_ref, v3_ref = _reference(x3, gain3, bias3, eps)
    assert jnp.allclose(out3, ref3, atol=1e-4, rtol=1e-4)
    assert jnp.allclose(bm3, m3_ref, atol=1e-5, rtol=1e-5)
    assert jnp.allclose(bv3, v3_ref, atol=1e-5, rtol=1e-5)

    print("KERNEL_OK")
</pallas_src>

<mosaic_0001>
module attributes {stable_mosaic.version = 11 : i64} {
  func.func @_bn_kernel(%arg0: i32, %arg1: memref<2x4x256xf32, #tpu.memory_space<vmem>>, %arg2: memref<4x1xf32, #tpu.memory_space<vmem>>, %arg3: memref<4x1xf32, #tpu.memory_space<vmem>>, %arg4: memref<2x4x256xf32, #tpu.memory_space<vmem>>, %arg5: memref<4x1xf32, #tpu.memory_space<vmem>>, %arg6: memref<4x1xf32, #tpu.memory_space<vmem>>) attributes {dimension_semantics = [#tpu.dimension_semantics<parallel>], iteration_bounds = array<i64: 1>, scalar_prefetch = 0 : i64, scratch_operands = 0 : i64, tpu.core_type = #tpu.core_type<tc>, window_params = [{transform_indices = @transform_0, window_bounds = array<i64: 2, 4, 256>}, {transform_indices = @transform_1, window_bounds = array<i64: 4, 1>}, {transform_indices = @transform_2, window_bounds = array<i64: 4, 1>}, {transform_indices = @transform_3, window_bounds = array<i64: 2, 4, 256>}, {transform_indices = @transform_4, window_bounds = array<i64: 4, 1>}, {transform_indices = @transform_5, window_bounds = array<i64: 4, 1>}]} {
    %c0 = arith.constant 0 : index
    %c0_0 = arith.constant 0 : index
    %c0_1 = arith.constant 0 : index
    %0 = vector.load %arg1[%c0, %c0_0, %c0_1] : memref<2x4x256xf32, #tpu.memory_space<vmem>>, vector<2x4x256xf32>
    %cst = arith.constant dense<0.000000e+00> : vector<4xf32>
    %1 = vector.multi_reduction <add>, %0, %cst [0, 2] : vector<2x4x256xf32> to vector<4xf32>
    %2 = vector.shape_cast %1 : vector<4xf32> to vector<1x4x1xf32>
    %cst_2 = arith.constant 0.001953125 : f32
    %3 = vector.broadcast %cst_2 : f32 to vector<1x4x1xf32>
    %4 = arith.mulf %2, %3 : vector<1x4x1xf32>
    %5 = arith.mulf %0, %0 : vector<2x4x256xf32>
    %cst_3 = arith.constant dense<0.000000e+00> : vector<4xf32>
    %6 = vector.multi_reduction <add>, %5, %cst_3 [0, 2] : vector<2x4x256xf32> to vector<4xf32>
    %7 = vector.shape_cast %6 : vector<4xf32> to vector<1x4x1xf32>
    %cst_4 = arith.constant 0.001953125 : f32
    %8 = vector.broadcast %cst_4 : f32 to vector<1x4x1xf32>
    %9 = arith.mulf %7, %8 : vector<1x4x1xf32>
    %10 = arith.mulf %4, %4 : vector<1x4x1xf32>
    %11 = arith.subf %9, %10 : vector<1x4x1xf32>
    %cst_5 = arith.constant 0.000000e+00 : f32
    %12 = vector.broadcast %cst_5 : f32 to vector<1x4x1xf32>
    %13 = arith.maximumf %11, %12 : vector<1x4x1xf32>
    %cst_6 = arith.constant 9.99999974E-6 : f32
    %14 = vector.broadcast %cst_6 : f32 to vector<1x4x1xf32>
    %15 = arith.addf %13, %14 : vector<1x4x1xf32>
    %16 = math.rsqrt %15 : vector<1x4x1xf32>
    %c0_7 = arith.constant 0 : index
    %c0_8 = arith.constant 0 : index
    %17 = vector.load %arg2[%c0_7, %c0_8] : memref<4x1xf32, #tpu.memory_space<vmem>>, vector<4x1xf32>
    %18 = vector.shape_cast %17 : vector<4x1xf32> to vector<1x4x1xf32>
    %19 = arith.mulf %16, %18 : vector<1x4x1xf32>
    %20 = arith.mulf %4, %19 : vector<1x4x1xf32>
    %c0_9 = arith.constant 0 : index
    %c0_10 = arith.constant 0 : index
    %21 = vector.load %arg3[%c0_9, %c0_10] : memref<4x1xf32, #tpu.memory_space<vmem>>, vector<4x1xf32>
    %22 = vector.shape_cast %21 : vector<4x1xf32> to vector<1x4x1xf32>
    %23 = arith.subf %20, %22 : vector<1x4x1xf32>
    %24 = vector.broadcast %19 : vector<1x4x1xf32> to vector<2x4x256xf32>
    %25 = arith.mulf %0, %24 : vector<2x4x256xf32>
    %26 = vector.broadcast %23 : vector<1x4x1xf32> to vector<2x4x256xf32>
    %27 = arith.subf %25, %26 : vector<2x4x256xf32>
    %c0_11 = arith.constant 0 : index
    %c0_12 = arith.constant 0 : index
    %c0_13 = arith.constant 0 : index
    %28 = vector.load %arg4[%c0_11, %c0_12, %c0_13] : memref<2x4x256xf32, #tpu.memory_space<vmem>>, vector<2x4x256xf32>
    tpu.vector_store %arg4[%c0_11, %c0_12, %c0_13], %27 {strides = array<i32>} : memref<2x4x256xf32, #tpu.memory_space<vmem>>, vector<2x4x256xf32>,
    %29 = vector.shape_cast %4 : vector<1x4x1xf32> to vector<4x1xf32>
    %c0_14 = arith.constant 0 : index
    %c0_15 = arith.constant 0 : index
    %30 = vector.load %arg5[%c0_14, %c0_15] : memref<4x1xf32, #tpu.memory_space<vmem>>, vector<4x1xf32>
    tpu.vector_store %arg5[%c0_14, %c0_15], %29 {strides = array<i32>} : memref<4x1xf32, #tpu.memory_space<vmem>>, vector<4x1xf32>,
    %31 = vector.shape_cast %13 : vector<1x4x1xf32> to vector<4x1xf32>
    %c0_16 = arith.constant 0 : index
    %c0_17 = arith.constant 0 : index
    %32 = vector.load %arg6[%c0_16, %c0_17] : memref<4x1xf32, #tpu.memory_space<vmem>>, vector<4x1xf32>
    tpu.vector_store %arg6[%c0_16, %c0_17], %31 {strides = array<i32>} : memref<4x1xf32, #tpu.memory_space<vmem>>, vector<4x1xf32>,
    return
  }
  func.func @transform_0(%arg0: i32) -> (i32, i32, i32) {
    %c0_i32 = arith.constant 0 : i32
    %c0_i32_0 = arith.constant 0 : i32
    %c0_i32_1 = arith.constant 0 : i32
    return %c0_i32, %arg0, %c0_i32_0 : i32, i32, i32
  }
  func.func @transform_1(%arg0: i32) -> (i32, i32) {
    %c0_i32 = arith.constant 0 : i32
    %c0_i32_0 = arith.constant 0 : i32
    return %arg0, %c0_i32 : i32, i32
  }
  func.func @transform_2(%arg0: i32) -> (i32, i32) {
    %c0_i32 = arith.constant 0 : i32
    %c0_i32_0 = arith.constant 0 : i32
    return %arg0, %c0_i32 : i32, i32
  }
  func.func @transform_3(%arg0: i32) -> (i32, i32, i32) {
    %c0_i32 = arith.constant 0 : i32
    %c0_i32_0 = arith.constant 0 : i32
    %c0_i32_1 = arith.constant 0 : i32
    return %c0_i32, %arg0, %c0_i32_0 : i32, i32, i32
  }
  func.func @transform_4(%arg0: i32) -> (i32, i32) {
    %c0_i32 = arith.constant 0 : i32
    %c0_i32_0 = arith.constant 0 : i32
    return %arg0, %c0_i32 : i32, i32
  }
  func.func @transform_5(%arg0: i32) -> (i32, i32) {
    %c0_i32 = arith.constant 0 : i32
    %c0_i32_0 = arith.constant 0 : i32
    return %arg0, %c0_i32 : i32, i32
  }
}

</mosaic_0001>

<llo_original>
// kernel: tpu_custom_call.1
$region0: #{tpu_custom_call.1}
  #allocation0 [shape = 'u32[]', space=smem, size = 0x4, offset = 0x4, fixed_abs, tag = 'smem constant byte address 0x4 - core index']
  #allocation1 [shape = 'u32[144,128]{1,0:T(1,128)}', space=vmem, size = 0x12000, scoped, tag = 'internal scratch']
  %s0 = inlined_call_operand.hbm [shape: f32[2,4,256], index: 0, kind: input, shape index: {}]
  %s1 = inlined_call_operand.vmem [shape: f32[4,1], index: 1, kind: input, shape index: {}]
  %s2 = inlined_call_operand.vmem [shape: f32[4,1], index: 2, kind: input, shape index: {}]
  %s3 = inlined_call_operand.hbm [shape: f32[2,4,256], index: 3, kind: output, shape index: {0}]
  %s4 = inlined_call_operand.vmem [shape: f32[4,1], index: 4, kind: output, shape index: {1}]
  %s5 = inlined_call_operand.vmem [shape: f32[4,1], index: 5, kind: output, shape index: {2}]
  %6 = xla_tuple %s3, %s4, %s5
  %s7 = sld [smem:[#allocation0]]
  $region42: #{tpu_custom_call.1} parent=0
    _
  %s9 = ssub.s32 1, %s7
  %s10 = scalar_select 0, %s9, %s7
  $region1: #{tpu_custom_call.1} parent=0
    #allocation2 [shape = 'u8[8192]{0}', space=vmem, size = 0x2000, scoped, tag = 'input window, operand 0, single buffered']
    #allocation3 [shape = 's32[1]{0}', space=sflag, size = 0x4, scoped, tag = 'scoped memory for tpu_custom_call.1']
    #allocation4 [shape = 's32[1]{0}', space=sflag, size = 0x4, scoped, tag = 'scoped memory for tpu_custom_call.1']
    #allocation5 [shape = 'u8[8192]{0}', space=vmem, size = 0x2000, scoped, tag = 'output window, operand 0, single buffered']
    %11 = vsyncpa [#allocation3], 0
    %12 = vsyncpa [#allocation4], 0
    // Predicated region
    $region2: #{tpu_custom_call.1} parent=1 // pred_check
      _
    $region3: #{tpu_custom_call.1} parent=1 // pred_check_branch
      %14 = sbr.rel (0) target = $region5
    $region4: #{tpu_custom_call.1} parent=1 // pred_region
      %s16 = ssub.s32 256, 256
      %17 = vsyncadd [#allocation3], %s16
      %s18 = sshll.u32 [#allocation2], 4
      %s19 = int_to_ptr.vmem [resolvable:$true] %s18
      %24 = dma.hbm_to_vmem [thread:$0]  %s0, 256, %s19, [#allocation3], 128, 128, 8
    $region5: #{tpu_custom_call.1} parent=1 // pred_fallthru
      _
    // Predicated region
    $region6: #{tpu_custom_call.1} parent=1 // pred_check
      _
    $region7: #{tpu_custom_call.1} parent=1 // pred_check_branch
      %26 = sbr.rel (0) target = $region9
    $region8: #{tpu_custom_call.1} parent=1 // pred_region
      _
    $region9: #{tpu_custom_call.1} parent=1 // pred_fallthru
      _
    // Predicated region
    $region10: #{tpu_custom_call.1} parent=1 // pred_check
      _
    $region11: #{tpu_custom_call.1} parent=1 // pred_check_branch
      %28 = sbr.rel (0) target = $region13
    $region12: #{tpu_custom_call.1} parent=1 // pred_region
      _
    $region13: #{tpu_custom_call.1} parent=1 // pred_fallthru
      _
    // Predicated region
    $region14: #{tpu_custom_call.1} parent=1 // pred_check
      _
    $region15: #{tpu_custom_call.1} parent=1 // pred_check_branch
      %30 = sbr.rel (0) target = $region17
    $region16: #{tpu_custom_call.1} parent=1 // pred_region
      %31 = dma.done [#allocation3], 256
    $region17: #{tpu_custom_call.1} parent=1 // pred_fallthru
      _
    %v32 = vld [vmem:[#allocation2] sm:$0xff]
    %v33 = vld [vmem:[#allocation2 + $0x8] sm:$0xff]
    %v36 = vcombine.high %v32, %v32
    %v37 = vcombine.high %v33, %v33
    %vm40 = vcmask 1043456
    %v41 = vsel %vm40, %v32, 0.0
    %v42 = vsel %vm40, %v36, 0.0
    %v43 = vadd.f32 %v41, %v42
    %v44 = vsel %vm40, %v33, 0.0
    %v45 = vadd.f32 %v43, %v44
    %v46 = vsel %vm40, %v37, 0.0
    %v47 = vadd.f32 %v45, %v46
    %48 = vadd.xlane.f32.xlu0 %v47
    %v49 = vpop.xlane.xlu0 %48
    %v50 = vmul.f32 %v49, 0.001953125
    %v51 = vmul.f32 %v32, %v32
    %v52 = vmul.f32 %v33, %v33
    %v55 = vcombine.high %v51, %v51
    %v56 = vcombine.high %v52, %v52
    %v59 = vsel %vm40, %v51, 0.0
    %v60 = vsel %vm40, %v55, 0.0
    %v61 = vadd.f32 %v59, %v60
    %v62 = vsel %vm40, %v52, 0.0
    %v63 = vadd.f32 %v61, %v62
    %v64 = vsel %vm40, %v56, 0.0
    %v65 = vadd.f32 %v63, %v64
    %66 = vadd.xlane.f32.xlu0 %v65
    %v67 = vpop.xlane.xlu0 %66
    %v68 = vmul.f32 %v67, 0.001953125
    %v69 = vmul.f32 %v50, %v50
    %v70 = vsub.f32 %v68, %v69
    %v71 = vmax.f32 %v70, 0.0
    %v72 = vadd.f32 %v71, 1e-05
    %v73 = vrsqrt.pop %v72
    %v74 = vld [vmem:[%s1] sm:$0xf]
    %v75 = vmul.f32 %v73, %v74
    %v76 = vmul.f32 %v50, %v75
    %v77 = vld [vmem:[%s2] sm:$0xf]
    %v78 = vsub.f32 %v76, %v77
    %80 = vset.pattern.permute.xlu0 0
    %81 = vperm.xlu0 %80, %v75
    %v82 = vpop.permute.xlu0 %81
    %v84 = vunpack.c.l.s4 839922192
    %v85 = vunpack.c.0.s8 %v84
    %v86 = vlaneseq
    %v87 = vshrl.u32 %v86, 7
    %v88 = vsub.s32 %v85, %v87
    %v89 = vrot.slane %v82, %v88
    %v91 = vmul.f32 %v32, %v89
    %v92 = vmul.f32 %v33, %v89
    %94 = vset.pattern.permute.xlu0 0
    %95 = vperm.xlu0 %94, %v78
    %v96 = vpop.permute.xlu0 %95
    %v98 = vunpack.c.l.s4 839922192
    %v99 = vunpack.c.0.s8 %v98
    %v100 = vlaneseq
    %v101 = vshrl.u32 %v100, 7
    %v102 = vsub.s32 %v99, %v101
    %v103 = vrot.slane %v96, %v102
    %v105 = vsub.f32 %v91, %v103
    %v106 = vsub.f32 %v92, %v103
    %107 = vst [vmem:[#allocation5] sm:$0xff] %v105
    %108 = vst [vmem:[#allocation5 + $0x8] sm:$0xff] %v106
    %vm109 = vcmask 3072
    %110 = vst.msk [vmem:[%s4] sm:$0xf] %vm109, %v50
    %111 = vst.msk [vmem:[%s5] sm:$0xf] %vm109, %v71
    // Predicated region
    $region18: #{tpu_custom_call.1} parent=1 // pred_check
      _
    $region19: #{tpu_custom_call.1} parent=1 // pred_check_branch
      %113 = sbr.rel (0) target = $region21
    $region20: #{tpu_custom_call.1} parent=1 // pred_region
      %s115 = ssub.s32 256, 256
      %116 = vsyncadd [#allocation4], %s115
      %s117 = sshll.u32 [#allocation5], 4
      %s118 = int_to_ptr.vmem [resolvable:$true] %s117
      %123 = dma.vmem_to_hbm [thread:$0]  %s118, 256, %s3, [#allocation4], 128, 128, 8
    $region21: #{tpu_custom_call.1} parent=1 // pred_fallthru
      _
    // Predicated region
    $region22: #{tpu_custom_call.1} parent=1 // pred_check
      _
    $region23: #{tpu_custom_call.1} parent=1 // pred_check_branch
      %125 = sbr.rel (0) target = $region25
    $region24: #{tpu_custom_call.1} parent=1 // pred_region
      _
    $region25: #{tpu_custom_call.1} parent=1 // pred_fallthru
      _
    // Predicated region
    $region26: #{tpu_custom_call.1} parent=1 // pred_check
      _
    $region27: #{tpu_custom_call.1} parent=1 // pred_check_branch
      %127 = sbr.rel (0) target = $region29
    $region28: #{tpu_custom_call.1} parent=1 // pred_region
      _
    $region29: #{tpu_custom_call.1} parent=1 // pred_fallthru
      _
    // Predicated region
    $region30: #{tpu_custom_call.1} parent=1 // pred_check
      _
    $region31: #{tpu_custom_call.1} parent=1 // pred_check_branch
      %129 = sbr.rel (0) target = $region33
    $region32: #{tpu_custom_call.1} parent=1 // pred_region
      %130 = dma.done [#allocation4], 256
    $region33: #{tpu_custom_call.1} parent=1 // pred_fallthru
      _
    // Predicated region
    $region34: #{tpu_custom_call.1} parent=1 // pred_check
      _
    $region35: #{tpu_custom_call.1} parent=1 // pred_check_branch
      %132 = sbr.rel (0) target = $region37
    $region36: #{tpu_custom_call.1} parent=1 // pred_region
      _
    $region37: #{tpu_custom_call.1} parent=1 // pred_fallthru
      _
    // Predicated region
    $region38: #{tpu_custom_call.1} parent=1 // pred_check
      _
    $region39: #{tpu_custom_call.1} parent=1 // pred_check_branch
      %134 = sbr.rel (0) target = $region41
    $region40: #{tpu_custom_call.1} parent=1 // pred_region
      _
    $region41: #{tpu_custom_call.1} parent=1 // pred_fallthru
      _
    %135 = vsyncpa [#allocation3], 1
    %136 = vsyncpa [#allocation4], 1

</llo_original>
